<compile_context>
chip_gen: v7x
topology: tpu7x:2x2x1
jax: 0.10.0
libtpu: 0.0.40
codegen_flags: <defaults>
</compile_context>

<pallas_src>
import jax
import jax.numpy as jnp
from jax.experimental import pallas as pl
from jax.experimental.pallas import tpu as pltpu


# ----------------------------- kernels --------------------------------------

def ffn_kernel_resident(x_ref, w1_ref, b1_ref, w2_ref, b2_ref, o_ref):
    """Weights-resident fast path: full W1/W2 in VMEM, single pass per row tile."""
    x = x_ref[...].astype(w1_ref.dtype)        # per-tile cast, hidden under MXU
    h = jnp.dot(x, w1_ref[...], preferred_element_type=jnp.float32)
    h = jnp.maximum(h + b1_ref[...], 0.0)      # bias + ReLU in f32
    y = jnp.dot(h.astype(w2_ref.dtype), w2_ref[...],
                preferred_element_type=jnp.float32)
    o_ref[...] = (y + b2_ref[...]).astype(o_ref.dtype)


def ffn_kernel_streamed(x_ref, w1_ref, b1_ref, w2_ref, b2_ref, o_ref, acc_ref):
    """Streamed fallback: hidden dim tiled; f32 accumulator over H (P3 pattern)."""
    h_idx = pl.program_id(1)

    @pl.when(h_idx == 0)
    def _init():
        acc_ref[...] = jnp.zeros_like(acc_ref)

    x = x_ref[...].astype(w1_ref.dtype)
    h = jnp.dot(x, w1_ref[...], preferred_element_type=jnp.float32)
    h = jnp.maximum(h + b1_ref[...], 0.0)
    acc_ref[...] += jnp.dot(h.astype(w2_ref.dtype), w2_ref[...],
                            preferred_element_type=jnp.float32)

    @pl.when(h_idx == pl.num_programs(1) - 1)
    def _finalize():
        o_ref[...] = (acc_ref[...] + b2_ref[...]).astype(o_ref.dtype)


# ----------------------------- planning helpers ------------------------------

def _cdiv(a, b):
    return (a + b - 1) // b


def _round_up(v, m):
    return _cdiv(v, m) * m


def _vmem_capacity_bytes():
    try:
        info = pltpu.get_tpu_info()
        cap = getattr(info, "vmem_capacity_bytes", None)
        if cap:
            return int(cap)
    except Exception:
        pass
    return 64 << 20  # conservative fallback (v7x per-TensorCore VMEM)


def _pick_hidden_tile(total, target, quantum=128):
    """Largest multiple of `quantum` that divides `total` and is <= target;
    falls back to `total` (full extent) when no such divisor exists."""
    cand = (min(target, total) // quantum) * quantum
    while cand >= quantum:
        if total % cand == 0:
            return cand
        cand -= quantum
    return total


def _pick_row_tile(m, target):
    """Row tile <= target (multiple of 16) that minimizes padding waste for m rows."""
    t = min(target, _round_up(m, 16))
    n = _cdiv(m, t)
    return _round_up(_cdiv(m, n), 16)


# ----------------------------- wrapper ---------------------------------------

def feedforward_pallas(x, w1, b1, w2, b2, *, tm=None, th=None,
                       compute_dtype=jnp.bfloat16, force_streamed=False):
    """x: (B, T, C). w1: (C, H), b1: (1, H) or (H,), w2: (H, C), b2: (1, C) or (C,).
    Returns (B, T, C) in x.dtype. Matmuls run in `compute_dtype` with f32 acc."""
    B, T, C = x.shape
    H = w1.shape[1]
    M = B * T

    # Generation-aware VMEM budget (v7x: 64 MiB per TC; v5e/v6e: 128 MiB).
    cap = _vmem_capacity_bytes()
    vmem_limit = min(int(0.62 * cap), 96 << 20)
    plan_budget = int(0.80 * vmem_limit)       # headroom for compiler scratch/sems
    small_vmem = cap <= (96 << 20)             # v7x-like chip (also has 2 TCs)

    if tm is None:
        # Roofline-derived row tile: larger on 128-MiB chips (v6e needs ~650
        # MXU flops per streamed weight byte), smaller on v7x (64 MiB VMEM).
        tm = 512 if small_vmem else 768
    if th is None:
        th = 512 if small_vmem else 1024

    tm_eff = _pick_row_tile(M, tm)
    # v7x has 2 TensorCores: ensure >= 2 "parallel" row tiles for small M.
    if small_vmem and M >= 32 and _cdiv(M, tm_eff) < 2:
        tm_eff = _round_up(_cdiv(M, 2), 16)

    x_b = x.dtype.itemsize
    o_b = x.dtype.itemsize
    w_b = jnp.dtype(compute_dtype).itemsize

    # Weights-resident estimate (conservative: assumes the auto-pipeline still
    # double-buffers the constant-index weight blocks).
    resident_bytes = (4 * C * H * w_b            # W1 + W2 (x2 buffers each)
                      + 2 * tm_eff * C * x_b     # x row tile (double-buffered)
                      + 2 * tm_eff * C * o_b     # out row tile
                      + tm_eff * H * 4           # f32 hidden temp
                      + 4 * (H + C) * 4)         # biases
    use_resident = (not force_streamed) and resident_bytes <= plan_budget

    th_eff = H
    if not use_resident:
        th_eff = _pick_hidden_tile(H, th)

        def _streamed_bytes(tm_, th_):
            return (2 * tm_ * C * x_b            # x row tile
                    + 2 * C * th_ * w_b          # W1 panel
                    + 2 * th_ * C * w_b          # W2 panel
                    + 2 * tm_ * C * o_b          # out row tile
                    + tm_ * C * 4                # f32 acc scratch
                    + tm_ * th_ * 4              # f32 hidden temp
                    + 4 * (th_ + C) * 4)         # biases

        # Shrink hidden panel first, then row tile, until the plan fits VMEM.
        while _streamed_bytes(tm_eff, th_eff) > plan_budget:
            if th_eff > 128:
                nt = _pick_hidden_tile(H, max(128, th_eff // 2))
                if nt < th_eff:
                    th_eff = nt
                    continue
            if tm_eff > 64:
                tm_eff = max(64, _round_up(tm_eff // 2, 16))
                continue
            break

    # Pad rows only when M is not tile-aligned (padded rows are sliced off below).
    Mp = _round_up(M, tm_eff)
    x2d = x.reshape(M, C)
    if Mp != M:
        x2d = jnp.pad(x2d, ((0, Mp - M), (0, 0)))

    # Weights are only cast when not already in the compute dtype (pass bf16
    # params for zero per-call conversion); x is cast per-tile inside the kernel.
    w1c = w1 if w1.dtype == jnp.dtype(compute_dtype) else w1.astype(compute_dtype)
    w2c = w2 if w2.dtype == jnp.dtype(compute_dtype) else w2.astype(compute_dtype)
    b1f = jnp.asarray(b1, jnp.float32).reshape(1, H)
    b2f = jnp.asarray(b2, jnp.float32).reshape(1, C)

    if use_resident:
        out2d = pl.pallas_call(
            ffn_kernel_resident,
            out_shape=jax.ShapeDtypeStruct((Mp, C), x.dtype),
            grid_spec=pltpu.PrefetchScalarGridSpec(
                num_scalar_prefetch=0,
                grid=(Mp // tm_eff,),
                in_specs=[
                    pl.BlockSpec((tm_eff, C), lambda i: (i, 0)),  # x row tile
                    pl.BlockSpec((C, H), lambda i: (0, 0)),       # W1 (fetched once)
                    pl.BlockSpec((1, H), lambda i: (0, 0)),       # b1
                    pl.BlockSpec((H, C), lambda i: (0, 0)),       # W2 (fetched once)
                    pl.BlockSpec((1, C), lambda i: (0, 0)),       # b2
                ],
                out_specs=pl.BlockSpec((tm_eff, C), lambda i: (i, 0)),
            ),
            compiler_params=pltpu.CompilerParams(
                dimension_semantics=("parallel",),
                vmem_limit_bytes=vmem_limit,
            ),
        )(x2d, w1c, b1f, w2c, b2f)
    else:
        out2d = pl.pallas_call(
            ffn_kernel_streamed,
            out_shape=jax.ShapeDtypeStruct((Mp, C), x.dtype),
            grid_spec=pltpu.PrefetchScalarGridSpec(
                num_scalar_prefetch=0,
                grid=(Mp // tm_eff, H // th_eff),   # reduction (H) axis last
                in_specs=[
                    pl.BlockSpec((tm_eff, C), lambda i, h: (i, 0)),   # x row tile
                    pl.BlockSpec((C, th_eff), lambda i, h: (0, h)),   # W1 panel
                    pl.BlockSpec((1, th_eff), lambda i, h: (0, h)),   # b1 panel
                    pl.BlockSpec((th_eff, C), lambda i, h: (h, 0)),   # W2 panel
                    pl.BlockSpec((1, C), lambda i, h: (0, 0)),        # b2 (resident)
                ],
                out_specs=pl.BlockSpec((tm_eff, C), lambda i, h: (i, 0)),
                scratch_shapes=[pltpu.VMEM((tm_eff, C), jnp.float32)],
            ),
            compiler_params=pltpu.CompilerParams(
                dimension_semantics=("parallel", "arbitrary"),
                vmem_limit_bytes=vmem_limit,
            ),
        )(x2d, w1c, b1f, w2c, b2f)

    if Mp != M:
        out2d = out2d[:M]
    return out2d.reshape(B, T, C)


def feedforward_ref(x, w1, b1, w2, b2):
    h = jnp.maximum(x @ w1 + b1.reshape(-1), 0.0)
    return h @ w2 + b2.reshape(-1)


if __name__ == "__main__":
    # ---- small config: n_embd=32 -> hidden=128, batch=2, seq=8, eval dropout ----
    B, T, C = 2, 8, 32
    H = 4 * C

    key = jax.random.PRNGKey(0)
    kx, k1, k2, k3, k4, kx2, k5, k6, k7, k8 = jax.random.split(key, 10)

    bound1 = 1.0 / jnp.sqrt(C)
    bound2 = 1.0 / jnp.sqrt(H)
    w1 = jax.random.uniform(k1, (C, H), jnp.float32, -bound1, bound1)   # (in, out)
    b1 = jax.random.uniform(k2, (1, H), jnp.float32, -bound1, bound1)
    w2 = jax.random.uniform(k3, (H, C), jnp.float32, -bound2, bound2)   # (in, out)
    b2 = jax.random.uniform(k4, (1, C), jnp.float32, -bound2, bound2)
    x = jax.random.normal(kx, (B, T, C), jnp.float32)
    ref = feedforward_ref(x, w1, b1, w2, b2)

    # 1) resident fast path, f32 compute: validates structure tightly.
    out_f32 = jax.block_until_ready(
        feedforward_pallas(x, w1, b1, w2, b2, compute_dtype=jnp.float32))
    assert out_f32.shape == (B, T, C)
    assert jnp.allclose(out_f32, ref, atol=1e-5, rtol=1e-5), "f32 resident mismatch"

    # 2) resident fast path, bf16 compute with pre-converted bf16 weights
    #    (zero per-call weight casts), loose tolerance vs f32 reference.
    w1_bf, w2_bf = w1.astype(jnp.bfloat16), w2.astype(jnp.bfloat16)
    out_bf16 = jax.block_until_ready(
        feedforward_pallas(x, w1_bf, b1, w2_bf, b2))
    assert out_bf16.shape == (B, T, C)
    assert jnp.allclose(out_bf16, ref, atol=2e-2, rtol=2e-2), "bf16 resident mismatch"

    # ---- slightly larger config to exercise the streamed fallback + padding ----
    B2, T2, C2 = 2, 63, 128          # M = 126 (ragged -> padded row tile)
    H2 = 4 * C2
    bnd1 = 1.0 / jnp.sqrt(C2)
    bnd2 = 1.0 / jnp.sqrt(H2)
    w1_2 = jax.random.uniform(k5, (C2, H2), jnp.float32, -bnd1, bnd1)
    b1_2 = jax.random.uniform(k6, (1, H2), jnp.float32, -bnd1, bnd1)
    w2_2 = jax.random.uniform(k7, (H2, C2), jnp.float32, -bnd2, bnd2)
    b2_2 = jax.random.uniform(k8, (1, C2), jnp.float32, -bnd2, bnd2)
    x2 = jax.random.normal(kx2, (B2, T2, C2), jnp.float32)
    ref2 = feedforward_ref(x2, w1_2, b1_2, w2_2, b2_2)

    # 3) streamed path (forced), f32 compute, multiple row tiles + hidden panels.
    out2_str = jax.block_until_ready(
        feedforward_pallas(x2, w1_2, b1_2, w2_2, b2_2, tm=64, th=128,
                           compute_dtype=jnp.float32, force_streamed=True))
    assert out2_str.shape == (B2, T2, C2)
    assert jnp.allclose(out2_str, ref2, atol=1e-5, rtol=1e-5), "streamed mismatch"

    # 4) auto dispatch (resident, lane-dense C=128), bf16 compute.
    out2_auto = jax.block_until_ready(
        feedforward_pallas(x2, w1_2.astype(jnp.bfloat16), b1_2,
                           w2_2.astype(jnp.bfloat16), b2_2))
    assert out2_auto.shape == (B2, T2, C2)
    assert jnp.allclose(out2_auto, ref2, atol=2e-2, rtol=2e-2), "bf16 auto mismatch"

    print("KERNEL_OK")
</pallas_src>

<mosaic_0001>
module attributes {stable_mosaic.version = 11 : i64} {
  func.func @ffn_kernel_resident(%arg0: i32, %arg1: memref<16x32xf32, #tpu.memory_space<vmem>>, %arg2: memref<32x128xf32, #tpu.memory_space<vmem>>, %arg3: memref<1x128xf32, #tpu.memory_space<vmem>>, %arg4: memref<128x32xf32, #tpu.memory_space<vmem>>, %arg5: memref<1x32xf32, #tpu.memory_space<vmem>>, %arg6: memref<16x32xf32, #tpu.memory_space<vmem>>) attributes {dimension_semantics = [#tpu.dimension_semantics<parallel>], iteration_bounds = array<i64: 1>, scalar_prefetch = 0 : i64, scratch_operands = 0 : i64, tpu.core_type = #tpu.core_type<tc>, window_params = [{transform_indices = @transform_0, window_bounds = array<i64: 16, 32>}, {pipeline_mode = #tpu.pipeline_mode<synchronous>, transform_indices = @transform_1, window_bounds = array<i64: 32, 128>}, {pipeline_mode = #tpu.pipeline_mode<synchronous>, transform_indices = @transform_2, window_bounds = array<i64: 1, 128>}, {pipeline_mode = #tpu.pipeline_mode<synchronous>, transform_indices = @transform_3, window_bounds = array<i64: 128, 32>}, {pipeline_mode = #tpu.pipeline_mode<synchronous>, transform_indices = @transform_4, window_bounds = array<i64: 1, 32>}, {transform_indices = @transform_5, window_bounds = array<i64: 16, 32>}]} {
    %c0 = arith.constant 0 : index
    %c0_0 = arith.constant 0 : index
    %0 = vector.load %arg1[%c0, %c0_0] : memref<16x32xf32, #tpu.memory_space<vmem>>, vector<16x32xf32>
    %c0_1 = arith.constant 0 : index
    %c0_2 = arith.constant 0 : index
    %1 = vector.load %arg2[%c0_1, %c0_2] : memref<32x128xf32, #tpu.memory_space<vmem>>, vector<32x128xf32>
    %cst = arith.constant dense<0.000000e+00> : vector<16x128xf32>
    %2 = tpu.matmul %0, %1, %cst {dimension_numbers = #tpu.dot_dimension_numbers<[1], [0], [0], [1], [0, 0, 1, 1], [], []>} : vector<16x32xf32>, vector<32x128xf32>, vector<16x128xf32> -> vector<16x128xf32>
    %c0_3 = arith.constant 0 : index
    %c0_4 = arith.constant 0 : index
    %3 = vector.load %arg3[%c0_3, %c0_4] : memref<1x128xf32, #tpu.memory_space<vmem>>, vector<1x128xf32>
    %4 = vector.broadcast %3 : vector<1x128xf32> to vector<16x128xf32>
    %5 = arith.addf %2, %4 : vector<16x128xf32>
    %cst_5 = arith.constant 0.000000e+00 : f32
    %6 = vector.broadcast %cst_5 : f32 to vector<16x128xf32>
    %7 = arith.maximumf %5, %6 : vector<16x128xf32>
    %c0_6 = arith.constant 0 : index
    %c0_7 = arith.constant 0 : index
    %8 = vector.load %arg4[%c0_6, %c0_7] : memref<128x32xf32, #tpu.memory_space<vmem>>, vector<128x32xf32>
    %cst_8 = arith.constant dense<0.000000e+00> : vector<16x32xf32>
    %9 = tpu.matmul %7, %8, %cst_8 {dimension_numbers = #tpu.dot_dimension_numbers<[1], [0], [0], [1], [0, 0, 1, 1], [], []>} : vector<16x128xf32>, vector<128x32xf32>, vector<16x32xf32> -> vector<16x32xf32>
    %c0_9 = arith.constant 0 : index
    %c0_10 = arith.constant 0 : index
    %10 = vector.load %arg5[%c0_9, %c0_10] : memref<1x32xf32, #tpu.memory_space<vmem>>, vector<1x32xf32>
    %11 = vector.broadcast %10 : vector<1x32xf32> to vector<16x32xf32>
    %12 = arith.addf %9, %11 : vector<16x32xf32>
    %c0_11 = arith.constant 0 : index
    %c0_12 = arith.constant 0 : index
    %13 = vector.load %arg6[%c0_11, %c0_12] : memref<16x32xf32, #tpu.memory_space<vmem>>, vector<16x32xf32>
    tpu.vector_store %arg6[%c0_11, %c0_12], %12 {strides = array<i32>} : memref<16x32xf32, #tpu.memory_space<vmem>>, vector<16x32xf32>,
    return
  }
  func.func @transform_0(%arg0: i32) -> (i32, i32) {
    %c0_i32 = arith.constant 0 : i32
    %c0_i32_0 = arith.constant 0 : i32
    return %arg0, %c0_i32 : i32, i32
  }
  func.func @transform_1(%arg0: i32) -> (i32, i32) {
    %c0_i32 = arith.constant 0 : i32
    %c0_i32_0 = arith.constant 0 : i32
    %c0_i32_1 = arith.constant 0 : i32
    return %c0_i32, %c0_i32_0 : i32, i32
  }
  func.func @transform_2(%arg0: i32) -> (i32, i32) {
    %c0_i32 = arith.constant 0 : i32
    %c0_i32_0 = arith.constant 0 : i32
    %c0_i32_1 = arith.constant 0 : i32
    return %c0_i32, %c0_i32_0 : i32, i32
  }
  func.func @transform_3(%arg0: i32) -> (i32, i32) {
    %c0_i32 = arith.constant 0 : i32
    %c0_i32_0 = arith.constant 0 : i32
    %c0_i32_1 = arith.constant 0 : i32
    return %c0_i32, %c0_i32_0 : i32, i32
  }
  func.func @transform_4(%arg0: i32) -> (i32, i32) {
    %c0_i32 = arith.constant 0 : i32
    %c0_i32_0 = arith.constant 0 : i32
    %c0_i32_1 = arith.constant 0 : i32
    return %c0_i32, %c0_i32_0 : i32, i32
  }
  func.func @transform_5(%arg0: i32) -> (i32, i32) {
    %c0_i32 = arith.constant 0 : i32
    %c0_i32_0 = arith.constant 0 : i32
    return %arg0, %c0_i32 : i32, i32
  }
}

</mosaic_0001>

<llo_original>
// kernel: tpu_custom_call.1
$region0: #{tpu_custom_call.1}
  #allocation0 [shape = 'u32[]', space=smem, size = 0x4, offset = 0x4, fixed_abs, tag = 'smem constant byte address 0x4 - core index']
  #allocation1 [shape = 'u32[144,128]{1,0:T(1,128)}', space=vmem, size = 0x12000, scoped, tag = 'internal scratch']
  %s0 = inlined_call_operand.vmem [shape: f32[16,32], index: 0, kind: input, shape index: {}]
  %s1 = inlined_call_operand.vmem [shape: f32[32,128], index: 1, kind: input, shape index: {}]
  %s2 = inlined_call_operand.vmem [shape: f32[1,128], index: 2, kind: input, shape index: {}]
  %s3 = inlined_call_operand.vmem [shape: f32[128,32], index: 3, kind: input, shape index: {}]
  %s4 = inlined_call_operand.vmem [shape: f32[1,32], index: 4, kind: input, shape index: {}]
  %s5 = inlined_call_operand.hbm [shape: f32[16,32], index: 5, kind: output, shape index: {}]
  %s6 = sld [smem:[#allocation0]]
  $region30: #{tpu_custom_call.1} parent=0
    _
  %s8 = ssub.s32 1, %s6
  %s9 = scalar_select 0, %s8, %s6
  $region1: #{tpu_custom_call.1} parent=0
    #allocation2 [shape = 'u8[8192]{0}', space=vmem, size = 0x2000, scoped, tag = 'output window, operand 0, single buffered']
    #allocation3 [shape = 's32[1]{0}', space=sflag, size = 0x4, scoped, tag = 'scoped memory for tpu_custom_call.1']
    %10 = vsyncpa [#allocation3], 0
    // Predicated region
    $region2: #{tpu_custom_call.1} parent=1 // pred_check
      _
    $region3: #{tpu_custom_call.1} parent=1 // pred_check_branch
      %12 = sbr.rel (0) target = $region5
    $region4: #{tpu_custom_call.1} parent=1 // pred_region
      _
    $region5: #{tpu_custom_call.1} parent=1 // pred_fallthru
      _
    // Predicated region
    $region6: #{tpu_custom_call.1} parent=1 // pred_check
      _
    $region7: #{tpu_custom_call.1} parent=1 // pred_check_branch
      %14 = sbr.rel (0) target = $region9
    $region8: #{tpu_custom_call.1} parent=1 // pred_region
      _
    $region9: #{tpu_custom_call.1} parent=1 // pred_fallthru
      _
    // Predicated region
    $region10: #{tpu_custom_call.1} parent=1 // pred_check
      _
    $region11: #{tpu_custom_call.1} parent=1 // pred_check_branch
      %16 = sbr.rel (0) target = $region13
    $region12: #{tpu_custom_call.1} parent=1 // pred_region
      _
    $region13: #{tpu_custom_call.1} parent=1 // pred_fallthru
      _
    // Predicated region
    $region14: #{tpu_custom_call.1} parent=1 // pred_check
      _
    $region15: #{tpu_custom_call.1} parent=1 // pred_check_branch
      %18 = sbr.rel (0) target = $region17
    $region16: #{tpu_custom_call.1} parent=1 // pred_region
      _
    $region17: #{tpu_custom_call.1} parent=1 // pred_fallthru
      _
    // Predicated region
    $region18: #{tpu_custom_call.1} parent=1 // pred_check
      _
    $region19: #{tpu_custom_call.1} parent=1 // pred_check_branch
      %20 = sbr.rel (0) target = $region21
    $region20: #{tpu_custom_call.1} parent=1 // pred_region
      _
    $region21: #{tpu_custom_call.1} parent=1 // pred_fallthru
      _
    %v21 = vld [vmem:[%s0] sm:$0xff]
    %v22 = vld [vmem:[%s0 + $0x8] sm:$0xff]
    %v23 = vld [vmem:[%s1] sm:$0xff]
    %v24 = vld [vmem:[%s1 + $0x8] sm:$0xff]
    %v25 = vld [vmem:[%s1 + $0x10] sm:$0xff]
    %v26 = vld [vmem:[%s1 + $0x18] sm:$0xff]
    %v27 = vld [vmem:[%s2] sm:$0x1]
    %v29 = vlaneseq
    %v30 = vshrl.u32 %v29, 7
    %v31 = vsub.s32 0, %v30
    %v32 = vrot.slane %v27, %v31
    %vm34 = vcmask 261120
    %v36 = vsel %vm34, %v21, 0
    %v39 = vsel %vm34, %v22, 0
    %41 = vmatprep.subr.mxu0 0.0
    %42 = vmatpush1.msra.mxu0 %v23
    %43 = vmatprep.subr.mxu0 0.0
    %44 = vmatpush1.msra.mxu0 %v24
    %45 = vmatprep.subr.mxu0 0.0
    %46 = vmatpush1.msra.mxu0 %v25
    %47 = vmatprep.subr.mxu0 0.0
    %48 = vmatpush1.msra.mxu0 %v26
    %49 = vmatprep.subr.mxu0 0.0
    %50 = vmatpush1.msra.mxu0 0.0
    %51 = vmatprep.subr.mxu0 0.0
    %52 = vmatpush1.msra.mxu0 0.0
    %53 = vmatprep.subr.mxu0 0.0
    %54 = vmatpush1.msra.mxu0 0.0
    %55 = vmatprep.subr.mxu0 0.0
    %56 = vmatpush1.msra.mxu0 0.0
    %57 = vmatprep.subr.mxu0 0.0
    %58 = vmatpush1.msra.mxu0 0.0
    %59 = vmatprep.subr.mxu0 0.0
    %60 = vmatpush1.msra.mxu0 0.0
    %61 = vmatprep.subr.mxu0 0.0
    %62 = vmatpush1.msra.mxu0 0.0
    %63 = vmatprep.subr.mxu0 0.0
    %64 = vmatpush1.msra.mxu0 0.0
    %65 = vmatprep.subr.mxu0 0.0
    %66 = vmatpush1.msra.mxu0 0.0
    %67 = vmatprep.subr.mxu0 0.0
    %68 = vmatpush1.msra.mxu0 0.0
    %69 = vmatprep.subr.mxu0 0.0
    %70 = vmatpush1.msra.mxu0 0.0
    %71 = vmatprep.subr.mxu0 0.0
    %72 = vmatpush1.msra.mxu0 0.0
    %73 = vmatprep.subr.mxu0 0.0
    %74 = vmatpush1.msra.mxu0 0.0
    %75 = vmatprep.subr.mxu0 0.0
    %76 = vmatpush1.msra.mxu0 0.0
    %77 = vmatprep.subr.mxu0 0.0
    %78 = vmatpush1.msra.mxu0 0.0
    %79 = vmatprep.subr.mxu0 0.0
    %80 = vmatpush1.msra.mxu0 0.0
    %81 = vmatprep.subr.mxu0 0.0
    %82 = vmatpush1.msra.mxu0 0.0
    %83 = vmatprep.subr.mxu0 0.0
    %84 = vmatpush1.msra.mxu0 0.0
    %85 = vmatprep.subr.mxu0 0.0
    %86 = vmatpush1.msra.mxu0 0.0
    %87 = vmatprep.subr.mxu0 0.0
    %88 = vmatpush1.msra.mxu0 0.0
    %89 = vmatprep.subr.mxu0 0.0
    %90 = vmatpush1.msra.mxu0 0.0
    %91 = vmatprep.subr.mxu0 0.0
    %92 = vmatpush1.msra.mxu0 0.0
    %93 = vmatprep.subr.mxu0 0.0
    %94 = vmatpush1.msra.mxu0 0.0
    %95 = vmatprep.subr.mxu0 0.0
    %96 = vmatpush1.msra.mxu0 0.0
    %97 = vmatprep.subr.mxu0 0.0
    %98 = vmatpush1.msra.mxu0 0.0
    %99 = vmatprep.subr.mxu0 0.0
    %100 = vmatpush1.msra.mxu0 0.0
    %101 = vmatprep.subr.mxu0 0.0
    %102 = vmatpush1.msra.mxu0 0.0
    %103 = vmatprep.subr.mxu0 0.0
    %104 = vmatpush1.msra.mxu0 0.0
    %105 = vmatprep.mubr.f32.mxu0 0.0
    %106 = vmatmul.mubr.f32.gmra.mrb[0].mxu0 %v36
    %v107 = vpop.f32.mrb[0].mxu0
    %v108 = vadd.f32 %v32, %v107
    %v109 = vpop.f32.mrb[0].mxu0
    %110 = vmatprep.mubr.f32.mxu0 0.0
    %111 = vmatmul.mubr.f32.gmra.mrb[0].mxu0 %v39
    %v112 = vpop.f32.mrb[0].mxu0
    %v113 = vadd.f32 %v32, %v112
    %v114 = vpop.f32.mrb[0].mxu0
    %115 = vdwg.mxu0
    %v116 = vmax.f32 %v108, 0.0
    %v117 = vmax.f32 %v113, 0.0
    %v118 = vld [vmem:[%s3] sm:$0xff]
    %v119 = vld [vmem:[%s3 + $0x8] sm:$0xff]
    %v120 = vld [vmem:[%s3 + $0x10] sm:$0xff]
    %v121 = vld [vmem:[%s3 + $0x18] sm:$0xff]
    %v122 = vld [vmem:[%s3 + $0x20] sm:$0xff]
    %v123 = vld [vmem:[%s3 + $0x28] sm:$0xff]
    %v124 = vld [vmem:[%s3 + $0x30] sm:$0xff]
    %v125 = vld [vmem:[%s3 + $0x38] sm:$0xff]
    %v126 = vld [vmem:[%s3 + $0x40] sm:$0xff]
    %v127 = vld [vmem:[%s3 + $0x48] sm:$0xff]
    %v128 = vld [vmem:[%s3 + $0x50] sm:$0xff]
    %v129 = vld [vmem:[%s3 + $0x58] sm:$0xff]
    %v130 = vld [vmem:[%s3 + $0x60] sm:$0xff]
    %v131 = vld [vmem:[%s3 + $0x68] sm:$0xff]
    %v132 = vld [vmem:[%s3 + $0x70] sm:$0xff]
    %v133 = vld [vmem:[%s3 + $0x78] sm:$0xff]
    %v134 = vld [vmem:[%s4] sm:$0x1]
    %v136 = vlaneseq
    %v137 = vshrl.u32 %v136, 7
    %v138 = vsub.s32 0, %v137
    %v139 = vrot.slane %v134, %v138
    %141 = vmatprep.subr.mxu0 0.0
    %142 = vmatpush1.msra.mxu0 %v118
    %143 = vmatprep.subr.mxu0 0.0
    %144 = vmatpush1.msra.mxu0 %v119
    %145 = vmatprep.subr.mxu0 0.0
    %146 = vmatpush1.msra.mxu0 %v120
    %147 = vmatprep.subr.mxu0 0.0
    %148 = vmatpush1.msra.mxu0 %v121
    %149 = vmatprep.subr.mxu0 0.0
    %150 = vmatpush1.msra.mxu0 %v122
    %151 = vmatprep.subr.mxu0 0.0
    %152 = vmatpush1.msra.mxu0 %v123
    %153 = vmatprep.subr.mxu0 0.0
    %154 = vmatpush1.msra.mxu0 %v124
    %155 = vmatprep.subr.mxu0 0.0
    %156 = vmatpush1.msra.mxu0 %v125
    %157 = vmatprep.subr.mxu0 0.0
    %158 = vmatpush1.msra.mxu0 %v126
    %159 = vmatprep.subr.mxu0 0.0
    %160 = vmatpush1.msra.mxu0 %v127
    %161 = vmatprep.subr.mxu0 0.0
    %162 = vmatpush1.msra.mxu0 %v128
    %163 = vmatprep.subr.mxu0 0.0
    %164 = vmatpush1.msra.mxu0 %v129
    %165 = vmatprep.subr.mxu0 0.0
    %166 = vmatpush1.msra.mxu0 %v130
    %167 = vmatprep.subr.mxu0 0.0
    %168 = vmatpush1.msra.mxu0 %v131
    %169 = vmatprep.subr.mxu0 0.0
    %170 = vmatpush1.msra.mxu0 %v132
    %171 = vmatprep.subr.mxu0 0.0
    %172 = vmatpush1.msra.mxu0 %v133
    %173 = vmatprep.subr.mxu0 0.0
    %174 = vmatpush1.msra.mxu0 0.0
    %175 = vmatprep.subr.mxu0 0.0
    %176 = vmatpush1.msra.mxu0 0.0
    %177 = vmatprep.subr.mxu0 0.0
    %178 = vmatpush1.msra.mxu0 0.0
    %179 = vmatprep.subr.mxu0 0.0
    %180 = vmatpush1.msra.mxu0 0.0
    %181 = vmatprep.subr.mxu0 0.0
    %182 = vmatpush1.msra.mxu0 0.0
    %183 = vmatprep.subr.mxu0 0.0
    %184 = vmatpush1.msra.mxu0 0.0
    %185 = vmatprep.subr.mxu0 0.0
    %186 = vmatpush1.msra.mxu0 0.0
    %187 = vmatprep.subr.mxu0 0.0
    %188 = vmatpush1.msra.mxu0 0.0
    %189 = vmatprep.subr.mxu0 0.0
    %190 = vmatpush1.msra.mxu0 0.0
    %191 = vmatprep.subr.mxu0 0.0
    %192 = vmatpush1.msra.mxu0 0.0
    %193 = vmatprep.subr.mxu0 0.0
    %194 = vmatpush1.msra.mxu0 0.0
    %195 = vmatprep.subr.mxu0 0.0
    %196 = vmatpush1.msra.mxu0 0.0
    %197 = vmatprep.subr.mxu0 0.0
    %198 = vmatpush1.msra.mxu0 0.0
    %199 = vmatprep.subr.mxu0 0.0
    %200 = vmatpush1.msra.mxu0 0.0
    %201 = vmatprep.subr.mxu0 0.0
    %202 = vmatpush1.msra.mxu0 0.0
    %203 = vmatprep.subr.mxu0 0.0
    %204 = vmatpush1.msra.mxu0 0.0
    %205 = vmatprep.mubr.f32.mxu0 0.0
    %206 = vmatmul.mubr.f32.gmra.mrb[0].mxu0 %v116
    %v207 = vpop.f32.mrb[0].mxu0
    %v208 = vadd.f32 %v139, %v207
    %v209 = vpop.f32.mrb[0].mxu0
    %210 = vmatprep.mubr.f32.mxu0 0.0
    %211 = vmatmul.mubr.f32.gmra.mrb[0].mxu0 %v117
    %v212 = vpop.f32.mrb[0].mxu0
    %v213 = vadd.f32 %v139, %v212
    %v214 = vpop.f32.mrb[0].mxu0
    %215 = vdwg.mxu0
    %216 = vst.msk [vmem:[#allocation2] sm:$0xff] %vm34, %v208
    %217 = vst.msk [vmem:[#allocation2 + $0x8] sm:$0xff] %vm34, %v213
    // Predicated region
    $region22: #{tpu_custom_call.1} parent=1 // pred_check
      _
    $region23: #{tpu_custom_call.1} parent=1 // pred_check_branch
      %219 = sbr.rel (0) target = $region25
    $region24: #{tpu_custom_call.1} parent=1 // pred_region
      %s221 = ssub.s32 256, 256
      %222 = vsyncadd [#allocation3], %s221
      %s223 = sshll.u32 [#allocation2], 4
      %s224 = int_to_ptr.vmem [resolvable:$true] %s223
      %229 = dma.vmem_to_hbm [thread:$0]  %s224, 256, %s5, [#allocation3], 128, 128, 8
    $region25: #{tpu_custom_call.1} parent=1 // pred_fallthru
      _
    // Predicated region
    $region26: #{tpu_custom_call.1} parent=1 // pred_check
      _
    $region27: #{tpu_custom_call.1} parent=1 // pred_check_branch
      %231 = sbr.rel (0) target = $region29
    $region28: #{tpu_custom_call.1} parent=1 // pred_region
      %232 = dma.done [#allocation3], 256
    $region29: #{tpu_custom_call.1} parent=1 // pred_fallthru
      _
    %233 = vsyncpa [#allocation3], 1

</llo_original>
